<compile_context>
chip_gen: v7x
topology: tpu7x:2x2x1
jax: 0.10.0
libtpu: 0.0.40
codegen_flags: <defaults>
</compile_context>

<pallas_src>
import functools

import jax
import jax.numpy as jnp
from jax.experimental import pallas as pl
from jax.experimental.pallas import tpu as pltpu

FACTOR = 2
NSLOTS = FACTOR ** 3          # 8 sub-voxel slots per coarse voxel


# ---------------------------------------------------------------------------
# host-side glue: identity-weight MinkowskiConvolution == 3-D pixel-unshuffle
# ---------------------------------------------------------------------------
def _space_to_depth(x):
    """(N, X, Y, Z, C) -> (N, X/2, Y/2, Z/2, 8*C); channel = (4*dz+2*dx+dy)*C + c."""
    N, X, Y, Z, C = x.shape
    f = FACTOR
    xb = x.reshape(N, X // f, f, Y // f, f, Z // f, f, C)    # (N,Xo,dx,Yo,dy,Zo,dz,C)
    xb = jnp.transpose(xb, (0, 1, 3, 5, 6, 2, 4, 7))         # (N,Xo,Yo,Zo,dz,dx,dy,C)
    return xb.reshape(N, X // f, Y // f, Z // f, NSLOTS * C)


def _space_to_depth_occ(occ):
    """(N, X, Y, Z) -> (N, X/2, Y/2, Z/2, 8); slot order matches _space_to_depth."""
    N, X, Y, Z = occ.shape
    f = FACTOR
    ob = occ.reshape(N, X // f, f, Y // f, f, Z // f, f)     # (N,Xo,dx,Yo,dy,Zo,dz)
    ob = jnp.transpose(ob, (0, 1, 3, 5, 6, 2, 4))            # (N,Xo,Yo,Zo,dz,dx,dy)
    return ob.reshape(N, X // f, Y // f, Z // f, NSLOTS)


# ---------------------------------------------------------------------------
# tiling helpers
# ---------------------------------------------------------------------------
def _block_byte_target():
    # ~1/48 of physical VMEM (3 streams x double-buffering x headroom), <= 2 MiB.
    try:
        cap = pltpu.get_tpu_info().vmem_capacity_bytes
    except Exception:                      # interpret mode / older runtimes
        cap = 64 * 1024 * 1024
    return max(512 * 1024, min(2 * 1024 * 1024, cap // 48))


def _pick_row_tile(rows, co, target_bytes):
    """Largest multiple-of-8 divisor of `rows` whose padded f32 block fits target."""
    padded_cols = -(-co // 128) * 128      # lane padding in VMEM
    row_bytes = padded_cols * 4
    t_max = max(8, target_bytes // row_bytes)
    if rows <= t_max:
        return rows
    best = None
    for t in range(8, int(t_max) + 1, 8):
        if rows % t == 0:
            best = t
    return best if best is not None else rows


# ---------------------------------------------------------------------------
# Pallas kernels
# ---------------------------------------------------------------------------
def _lane_roll(v, shift):
    """Cyclic shift of the last (lane) axis by `shift` (exact, pure data movement)."""
    return jnp.concatenate([v[:, shift:], v[:, :shift]], axis=-1)


def _squeeze_avg_kernel(x_ref, occ_ref, bcast_ref, out_ref, *, C):
    # x_ref  : (tR, 8*C)  features, slot-major channel layout
    # occ_ref: (tR, 8)    per-slot occupancy in {0,1}
    # bcast  : (8, 8*C)   0/1 selector: occ @ bcast replicates occ[:, s] over C lanes
    xs = x_ref[...]
    occ = occ_ref[...]
    # Exact (single 0/1 term per output element) at any MXU precision; MXU is idle.
    occ_wide = jnp.dot(occ, bcast_ref[...], preferred_element_type=jnp.float32)
    xm = xs * occ_wide                      # absent sub-voxels contribute 0

    # MinkowskiAvgPooling: sum / count over *existing* sub-voxels of each 2x2x2
    # block, replicated to all 8 slots.  Cyclic log-doubling over the slot groups
    # keeps every temporary lane-dense (no (tR, C) narrow values, no 8-way
    # concatenates); adds are exact f32.
    sum_rep = xm
    cnt_rep = occ_wide
    for shift in (C, 2 * C, 4 * C):
        sum_rep = sum_rep + _lane_roll(sum_rep, shift)
        cnt_rep = cnt_rep + _lane_roll(cnt_rep, shift)

    avg_rep = sum_rep / jnp.maximum(cnt_rep, 1.0)
    # output = squeeze(input) + |mask - 1| * avg  ==  select(existing, x, avg),
    # and an output coordinate exists only if >= 1 sub-voxel exists.
    out = jnp.where(occ_wide > 0.5, xs, avg_rep)
    out = jnp.where(cnt_rep > 0.5, out, 0.0)
    out_ref[...] = out.astype(out_ref.dtype)


def _squeeze_naive_kernel(x_ref, occ_ref, bcast_ref, out_ref, *, C):
    del C
    occ_wide = jnp.dot(occ_ref[...], bcast_ref[...],
                       preferred_element_type=jnp.float32)
    out_ref[...] = (x_ref[...] * occ_wide).astype(out_ref.dtype)


# ---------------------------------------------------------------------------
# wrappers
# ---------------------------------------------------------------------------
def sparse_squeeze(x, occ, squeeze_type="avg"):
    """forward(input, reverse=False) of SparseSqueezeLayer (dense analogue)."""
    N, X, Y, Z, C = x.shape
    f = FACTOR
    Xo, Yo, Zo, CO = X // f, Y // f, Z // f, C * NSLOTS

    if squeeze_type == "avg":
        kern = _squeeze_avg_kernel
    elif squeeze_type == "naive":
        kern = _squeeze_naive_kernel
    else:
        # 'nn' mode raises NotImplementedError in the reference module too.
        raise NotImplementedError("The nearest neighbor mode has not been implemented")

    rows = N * Xo * Yo * Zo
    # pixel-unshuffle of the features (one XLA transpose pass), then flatten to rows
    x2 = _space_to_depth(x).reshape(rows, CO)
    # occupancy stays narrow: 8 floats per coarse voxel instead of 8*C
    occ2 = _space_to_depth_occ(occ).astype(jnp.float32).reshape(rows, NSLOTS)
    # 0/1 selector replicating occ[:, s] over output channels [s*C, (s+1)*C)
    bcast = jnp.repeat(jnp.eye(NSLOTS, dtype=jnp.float32), C, axis=1)

    tr = _pick_row_tile(rows, CO, _block_byte_target())
    grid = (rows // tr,)

    out2 = pl.pallas_call(
        functools.partial(kern, C=C),
        out_shape=jax.ShapeDtypeStruct((rows, CO), x.dtype),
        grid=grid,
        in_specs=[
            pl.BlockSpec((tr, CO), lambda i: (i, 0)),
            pl.BlockSpec((tr, NSLOTS), lambda i: (i, 0)),
            pl.BlockSpec((NSLOTS, CO), lambda i: (0, 0)),
        ],
        out_specs=pl.BlockSpec((tr, CO), lambda i: (i, 0)),
        compiler_params=pltpu.CompilerParams(
            dimension_semantics=("parallel",),
            vmem_limit_bytes=32 * 1024 * 1024,
        ),
    )(x2, occ2, bcast)
    return out2.reshape(N, Xo, Yo, Zo, CO)


def sparse_unsqueeze(y):
    """forward(input, reverse=True): identity-weight transposed conv == depth-to-space.

    Pure permutation with zero arithmetic; a Pallas copy kernel here would only add
    an extra HBM round trip, so it stays a single XLA reshape/transpose.
    """
    N, Xo, Yo, Zo, CO = y.shape
    f = FACTOR
    C = CO // NSLOTS
    s = y.reshape(N, Xo, Yo, Zo, f, f, f, C)                 # (N,Xo,Yo,Zo,dz,dx,dy,C)
    s = jnp.transpose(s, (0, 1, 5, 2, 6, 3, 4, 7))           # (N,Xo,dx,Yo,dy,Zo,dz,C)
    return s.reshape(N, Xo * f, Yo * f, Zo * f, C)


# ---------------------------------------------------------------------------
# pure-JAX reference (for correctness check only)
# ---------------------------------------------------------------------------
def _reference_squeeze_avg(x, occ):
    C = x.shape[-1]
    s2d = _space_to_depth(x * occ[..., None])
    occ_s2d = _space_to_depth(jnp.broadcast_to(occ[..., None], x.shape))
    blk_sum = sum(s2d[..., s * C:(s + 1) * C] for s in range(NSLOTS))
    blk_cnt = sum(occ_s2d[..., s * C:(s + 1) * C] for s in range(NSLOTS))
    avg = blk_sum / jnp.maximum(blk_cnt, 1.0)
    out = s2d + (1.0 - occ_s2d) * jnp.tile(avg, (1, 1, 1, 1, NSLOTS))
    return jnp.where(jnp.tile(blk_cnt, (1, 1, 1, 1, NSLOTS)) > 0.0, out, 0.0)


if __name__ == "__main__":
    key = jax.random.PRNGKey(0)
    kx, ko = jax.random.split(key)

    N, C, X = 2, 4, 8                                        # small, consistent shapes
    x = jax.random.normal(kx, (N, X, X, X, C), dtype=jnp.float32)
    occ = (jax.random.uniform(ko, (N, X, X, X)) < 0.7).astype(jnp.float32)

    y_avg = jax.block_until_ready(sparse_squeeze(x, occ, "avg"))
    y_naive = jax.block_until_ready(sparse_squeeze(x, occ, "naive"))
    x_rec = jax.block_until_ready(
        sparse_unsqueeze(sparse_squeeze(x, jnp.ones_like(occ), "naive")))

    assert y_avg.shape == (N, X // 2, X // 2, X // 2, C * NSLOTS)
    assert jnp.allclose(y_avg, _reference_squeeze_avg(x, occ), atol=1e-5, rtol=1e-5)
    assert jnp.allclose(y_naive, _space_to_depth(x * occ[..., None]), atol=1e-5, rtol=1e-5)
    assert jnp.allclose(x_rec, x, atol=1e-5, rtol=1e-5)      # squeeze∘unsqueeze identity

    print("KERNEL_OK")
</pallas_src>

<mosaic_0001>
module attributes {stable_mosaic.version = 11 : i64} {
  func.func @_squeeze_avg_kernel(%arg0: i32, %arg1: memref<128x32xf32, #tpu.memory_space<vmem>>, %arg2: memref<128x8xf32, #tpu.memory_space<vmem>>, %arg3: memref<8x32xf32, #tpu.memory_space<vmem>>, %arg4: memref<128x32xf32, #tpu.memory_space<vmem>>) attributes {dimension_semantics = [#tpu.dimension_semantics<parallel>], iteration_bounds = array<i64: 1>, scalar_prefetch = 0 : i64, scratch_operands = 0 : i64, tpu.core_type = #tpu.core_type<tc>, window_params = [{transform_indices = @transform_0, window_bounds = array<i64: 128, 32>}, {transform_indices = @transform_1, window_bounds = array<i64: 128, 8>}, {pipeline_mode = #tpu.pipeline_mode<synchronous>, transform_indices = @transform_2, window_bounds = array<i64: 8, 32>}, {transform_indices = @transform_3, window_bounds = array<i64: 128, 32>}]} {
    %c0 = arith.constant 0 : index
    %c0_0 = arith.constant 0 : index
    %0 = vector.load %arg1[%c0, %c0_0] : memref<128x32xf32, #tpu.memory_space<vmem>>, vector<128x32xf32>
    %c0_1 = arith.constant 0 : index
    %c0_2 = arith.constant 0 : index
    %1 = vector.load %arg2[%c0_1, %c0_2] : memref<128x8xf32, #tpu.memory_space<vmem>>, vector<128x8xf32>
    %c0_3 = arith.constant 0 : index
    %c0_4 = arith.constant 0 : index
    %2 = vector.load %arg3[%c0_3, %c0_4] : memref<8x32xf32, #tpu.memory_space<vmem>>, vector<8x32xf32>
    %cst = arith.constant dense<0.000000e+00> : vector<128x32xf32>
    %3 = tpu.matmul %1, %2, %cst {dimension_numbers = #tpu.dot_dimension_numbers<[1], [0], [0], [1], [0, 0, 1, 1], [], []>} : vector<128x8xf32>, vector<8x32xf32>, vector<128x32xf32> -> vector<128x32xf32>
    %4 = arith.mulf %0, %3 : vector<128x32xf32>
    %5 = vector.extract_strided_slice %4 {offsets = [0, 4], sizes = [128, 28], strides = [1, 1]} : vector<128x32xf32> to vector<128x28xf32>
    %6 = vector.extract_strided_slice %4 {offsets = [0, 0], sizes = [128, 4], strides = [1, 1]} : vector<128x32xf32> to vector<128x4xf32>
    %7 = tpu.concatenate %5, %6 in 1 : vector<128x28xf32>, vector<128x4xf32> -> vector<128x32xf32>
    %8 = arith.addf %4, %7 : vector<128x32xf32>
    %9 = vector.extract_strided_slice %3 {offsets = [0, 4], sizes = [128, 28], strides = [1, 1]} : vector<128x32xf32> to vector<128x28xf32>
    %10 = vector.extract_strided_slice %3 {offsets = [0, 0], sizes = [128, 4], strides = [1, 1]} : vector<128x32xf32> to vector<128x4xf32>
    %11 = tpu.concatenate %9, %10 in 1 : vector<128x28xf32>, vector<128x4xf32> -> vector<128x32xf32>
    %12 = arith.addf %3, %11 : vector<128x32xf32>
    %13 = vector.extract_strided_slice %8 {offsets = [0, 8], sizes = [128, 24], strides = [1, 1]} : vector<128x32xf32> to vector<128x24xf32>
    %14 = vector.extract_strided_slice %8 {offsets = [0, 0], sizes = [128, 8], strides = [1, 1]} : vector<128x32xf32> to vector<128x8xf32>
    %15 = tpu.concatenate %13, %14 in 1 : vector<128x24xf32>, vector<128x8xf32> -> vector<128x32xf32>
    %16 = arith.addf %8, %15 : vector<128x32xf32>
    %17 = vector.extract_strided_slice %12 {offsets = [0, 8], sizes = [128, 24], strides = [1, 1]} : vector<128x32xf32> to vector<128x24xf32>
    %18 = vector.extract_strided_slice %12 {offsets = [0, 0], sizes = [128, 8], strides = [1, 1]} : vector<128x32xf32> to vector<128x8xf32>
    %19 = tpu.concatenate %17, %18 in 1 : vector<128x24xf32>, vector<128x8xf32> -> vector<128x32xf32>
    %20 = arith.addf %12, %19 : vector<128x32xf32>
    %21 = vector.extract_strided_slice %16 {offsets = [0, 16], sizes = [128, 16], strides = [1, 1]} : vector<128x32xf32> to vector<128x16xf32>
    %22 = vector.extract_strided_slice %16 {offsets = [0, 0], sizes = [128, 16], strides = [1, 1]} : vector<128x32xf32> to vector<128x16xf32>
    %23 = tpu.concatenate %21, %22 in 1 : vector<128x16xf32>, vector<128x16xf32> -> vector<128x32xf32>
    %24 = arith.addf %16, %23 : vector<128x32xf32>
    %25 = vector.extract_strided_slice %20 {offsets = [0, 16], sizes = [128, 16], strides = [1, 1]} : vector<128x32xf32> to vector<128x16xf32>
    %26 = vector.extract_strided_slice %20 {offsets = [0, 0], sizes = [128, 16], strides = [1, 1]} : vector<128x32xf32> to vector<128x16xf32>
    %27 = tpu.concatenate %25, %26 in 1 : vector<128x16xf32>, vector<128x16xf32> -> vector<128x32xf32>
    %28 = arith.addf %20, %27 : vector<128x32xf32>
    %cst_5 = arith.constant 1.000000e+00 : f32
    %29 = vector.broadcast %cst_5 : f32 to vector<128x32xf32>
    %30 = arith.maximumf %28, %29 : vector<128x32xf32>
    %31 = arith.divf %24, %30 : vector<128x32xf32>
    %cst_6 = arith.constant 5.000000e-01 : f32
    %32 = vector.broadcast %cst_6 : f32 to vector<128x32xf32>
    %33 = arith.cmpf ogt, %3, %32 : vector<128x32xf32>
    %34 = arith.select %33, %0, %31 : vector<128x32xi1>, vector<128x32xf32>
    %cst_7 = arith.constant 5.000000e-01 : f32
    %35 = vector.broadcast %cst_7 : f32 to vector<128x32xf32>
    %36 = arith.cmpf ogt, %28, %35 : vector<128x32xf32>
    %cst_8 = arith.constant 0.000000e+00 : f32
    %37 = vector.broadcast %cst_8 : f32 to vector<128x32xf32>
    %38 = arith.select %36, %34, %37 : vector<128x32xi1>, vector<128x32xf32>
    %c0_9 = arith.constant 0 : index
    %c0_10 = arith.constant 0 : index
    %39 = vector.load %arg4[%c0_9, %c0_10] : memref<128x32xf32, #tpu.memory_space<vmem>>, vector<128x32xf32>
    tpu.vector_store %arg4[%c0_9, %c0_10], %38 {strides = array<i32>} : memref<128x32xf32, #tpu.memory_space<vmem>>, vector<128x32xf32>,
    return
  }
  func.func @transform_0(%arg0: i32) -> (i32, i32) {
    %c0_i32 = arith.constant 0 : i32
    %c0_i32_0 = arith.constant 0 : i32
    return %arg0, %c0_i32 : i32, i32
  }
  func.func @transform_1(%arg0: i32) -> (i32, i32) {
    %c0_i32 = arith.constant 0 : i32
    %c0_i32_0 = arith.constant 0 : i32
    return %arg0, %c0_i32 : i32, i32
  }
  func.func @transform_2(%arg0: i32) -> (i32, i32) {
    %c0_i32 = arith.constant 0 : i32
    %c0_i32_0 = arith.constant 0 : i32
    %c0_i32_1 = arith.constant 0 : i32
    return %c0_i32, %c0_i32_0 : i32, i32
  }
  func.func @transform_3(%arg0: i32) -> (i32, i32) {
    %c0_i32 = arith.constant 0 : i32
    %c0_i32_0 = arith.constant 0 : i32
    return %arg0, %c0_i32 : i32, i32
  }
}

</mosaic_0001>

<llo_original>
// kernel: tpu_custom_call.1
$region0: #{tpu_custom_call.1}
  #allocation0 [shape = 'u32[]', space=smem, size = 0x4, offset = 0x4, fixed_abs, tag = 'smem constant byte address 0x4 - core index']
  #allocation1 [shape = 'u32[144,128]{1,0:T(1,128)}', space=vmem, size = 0x12000, scoped, tag = 'internal scratch']
  %s0 = inlined_call_operand.vmem [shape: f32[128,32], index: 0, kind: input, shape index: {}]
  %s1 = inlined_call_operand.vmem [shape: f32[128,8], index: 1, kind: input, shape index: {}]
  %s2 = inlined_call_operand.vmem [shape: f32[8,32], index: 2, kind: input, shape index: {}]
  %s3 = inlined_call_operand.vmem [shape: f32[128,32], index: 3, kind: output, shape index: {}]
  %s4 = sld [smem:[#allocation0]]
  $region22: #{tpu_custom_call.1} parent=0
    _
  %s6 = ssub.s32 1, %s4
  %s7 = scalar_select 0, %s6, %s4
  // Predicated region
  $region2: #{tpu_custom_call.1} parent=0 // pred_check
    _
  $region3: #{tpu_custom_call.1} parent=0 // pred_check_branch
    %9 = sbr.rel (0) target = $region5
  $region4: #{tpu_custom_call.1} parent=0 // pred_region
    _
  $region5: #{tpu_custom_call.1} parent=0 // pred_fallthru
    _
  // Predicated region
  $region6: #{tpu_custom_call.1} parent=0 // pred_check
    _
  $region7: #{tpu_custom_call.1} parent=0 // pred_check_branch
    %11 = sbr.rel (0) target = $region9
  $region8: #{tpu_custom_call.1} parent=0 // pred_region
    _
  $region9: #{tpu_custom_call.1} parent=0 // pred_fallthru
    _
  // Predicated region
  $region10: #{tpu_custom_call.1} parent=0 // pred_check
    _
  $region11: #{tpu_custom_call.1} parent=0 // pred_check_branch
    %13 = sbr.rel (0) target = $region13
  $region12: #{tpu_custom_call.1} parent=0 // pred_region
    _
  $region13: #{tpu_custom_call.1} parent=0 // pred_fallthru
    _
  %v14 = vld [vmem:[%s0] sm:$0xff]
  %v15 = vld [vmem:[%s0 + $0x8] sm:$0xff]
  %v16 = vld [vmem:[%s0 + $0x10] sm:$0xff]
  %v17 = vld [vmem:[%s0 + $0x18] sm:$0xff]
  %v18 = vld [vmem:[%s0 + $0x20] sm:$0xff]
  %v19 = vld [vmem:[%s0 + $0x28] sm:$0xff]
  %v20 = vld [vmem:[%s0 + $0x30] sm:$0xff]
  %v21 = vld [vmem:[%s0 + $0x38] sm:$0xff]
  %v22 = vld [vmem:[%s0 + $0x40] sm:$0xff]
  %v23 = vld [vmem:[%s0 + $0x48] sm:$0xff]
  %v24 = vld [vmem:[%s0 + $0x50] sm:$0xff]
  %v25 = vld [vmem:[%s0 + $0x58] sm:$0xff]
  %v26 = vld [vmem:[%s0 + $0x60] sm:$0xff]
  %v27 = vld [vmem:[%s0 + $0x68] sm:$0xff]
  %v28 = vld [vmem:[%s0 + $0x70] sm:$0xff]
  %v29 = vld [vmem:[%s0 + $0x78] sm:$0xff]
  %v30 = vld [vmem:[%s1] sm:$0xff]
  %v31 = vld [vmem:[%s1 + $0x8] sm:$0xff]
  %v32 = vld [vmem:[%s1 + $0x10] sm:$0xff]
  %v33 = vld [vmem:[%s1 + $0x18] sm:$0xff]
  %v34 = vld [vmem:[%s1 + $0x20] sm:$0xff]
  %v35 = vld [vmem:[%s1 + $0x28] sm:$0xff]
  %v36 = vld [vmem:[%s1 + $0x30] sm:$0xff]
  %v37 = vld [vmem:[%s1 + $0x38] sm:$0xff]
  %v38 = vld [vmem:[%s1 + $0x40] sm:$0xff]
  %v39 = vld [vmem:[%s1 + $0x48] sm:$0xff]
  %v40 = vld [vmem:[%s1 + $0x50] sm:$0xff]
  %v41 = vld [vmem:[%s1 + $0x58] sm:$0xff]
  %v42 = vld [vmem:[%s1 + $0x60] sm:$0xff]
  %v43 = vld [vmem:[%s1 + $0x68] sm:$0xff]
  %v44 = vld [vmem:[%s1 + $0x70] sm:$0xff]
  %v45 = vld [vmem:[%s1 + $0x78] sm:$0xff]
  %v46 = vld [vmem:[%s2] sm:$0xff]
  %vm47 = vcmask 64512
  %v49 = vsel %vm47, %v30, 0
  %v52 = vsel %vm47, %v31, 0
  %v55 = vsel %vm47, %v32, 0
  %v58 = vsel %vm47, %v33, 0
  %v61 = vsel %vm47, %v34, 0
  %v64 = vsel %vm47, %v35, 0
  %v67 = vsel %vm47, %v36, 0
  %v70 = vsel %vm47, %v37, 0
  %v73 = vsel %vm47, %v38, 0
  %v76 = vsel %vm47, %v39, 0
  %v79 = vsel %vm47, %v40, 0
  %v82 = vsel %vm47, %v41, 0
  %v85 = vsel %vm47, %v42, 0
  %v88 = vsel %vm47, %v43, 0
  %v91 = vsel %vm47, %v44, 0
  %v94 = vsel %vm47, %v45, 0
  %96 = vmatprep.subr.mxu0 0.0
  %97 = vmatpush1.msra.mxu0 %v46
  %98 = vmatprep.subr.mxu0 0.0
  %99 = vmatpush1.msra.mxu0 0.0
  %100 = vmatprep.subr.mxu0 0.0
  %101 = vmatpush1.msra.mxu0 0.0
  %102 = vmatprep.subr.mxu0 0.0
  %103 = vmatpush1.msra.mxu0 0.0
  %104 = vmatprep.subr.mxu0 0.0
  %105 = vmatpush1.msra.mxu0 0.0
  %106 = vmatprep.subr.mxu0 0.0
  %107 = vmatpush1.msra.mxu0 0.0
  %108 = vmatprep.subr.mxu0 0.0
  %109 = vmatpush1.msra.mxu0 0.0
  %110 = vmatprep.subr.mxu0 0.0
  %111 = vmatpush1.msra.mxu0 0.0
  %112 = vmatprep.subr.mxu0 0.0
  %113 = vmatpush1.msra.mxu0 0.0
  %114 = vmatprep.subr.mxu0 0.0
  %115 = vmatpush1.msra.mxu0 0.0
  %116 = vmatprep.subr.mxu0 0.0
  %117 = vmatpush1.msra.mxu0 0.0
  %118 = vmatprep.subr.mxu0 0.0
  %119 = vmatpush1.msra.mxu0 0.0
  %120 = vmatprep.subr.mxu0 0.0
  %121 = vmatpush1.msra.mxu0 0.0
  %122 = vmatprep.subr.mxu0 0.0
  %123 = vmatpush1.msra.mxu0 0.0
  %124 = vmatprep.subr.mxu0 0.0
  %125 = vmatpush1.msra.mxu0 0.0
  %126 = vmatprep.subr.mxu0 0.0
  %127 = vmatpush1.msra.mxu0 0.0
  %128 = vmatprep.subr.mxu0 0.0
  %129 = vmatpush1.msra.mxu0 0.0
  %130 = vmatprep.subr.mxu0 0.0
  %131 = vmatpush1.msra.mxu0 0.0
  %132 = vmatprep.subr.mxu0 0.0
  %133 = vmatpush1.msra.mxu0 0.0
  %134 = vmatprep.subr.mxu0 0.0
  %135 = vmatpush1.msra.mxu0 0.0
  %136 = vmatprep.subr.mxu0 0.0
  %137 = vmatpush1.msra.mxu0 0.0
  %138 = vmatprep.subr.mxu0 0.0
  %139 = vmatpush1.msra.mxu0 0.0
  %140 = vmatprep.subr.mxu0 0.0
  %141 = vmatpush1.msra.mxu0 0.0
  %142 = vmatprep.subr.mxu0 0.0
  %143 = vmatpush1.msra.mxu0 0.0
  %144 = vmatprep.subr.mxu0 0.0
  %145 = vmatpush1.msra.mxu0 0.0
  %146 = vmatprep.subr.mxu0 0.0
  %147 = vmatpush1.msra.mxu0 0.0
  %148 = vmatprep.subr.mxu0 0.0
  %149 = vmatpush1.msra.mxu0 0.0
  %150 = vmatprep.subr.mxu0 0.0
  %151 = vmatpush1.msra.mxu0 0.0
  %152 = vmatprep.subr.mxu0 0.0
  %153 = vmatpush1.msra.mxu0 0.0
  %154 = vmatprep.subr.mxu0 0.0
  %155 = vmatpush1.msra.mxu0 0.0
  %156 = vmatprep.subr.mxu0 0.0
  %157 = vmatpush1.msra.mxu0 0.0
  %158 = vmatprep.subr.mxu0 0.0
  %159 = vmatpush1.msra.mxu0 0.0
  %160 = vmatprep.mubr.f32.mxu0 0.0
  %161 = vmatmul.mubr.f32.gmra.mrb[0].mxu0 %v49
  %v162 = vpop.f32.mrb[0].mxu0
  %v163 = vadd.f32 0.0, %v162
  %v164 = vpop.f32.mrb[0].mxu0
  %165 = vmatprep.mubr.f32.mxu0 0.0
  %166 = vmatmul.mubr.f32.gmra.mrb[0].mxu0 %v52
  %v167 = vpop.f32.mrb[0].mxu0
  %v168 = vadd.f32 0.0, %v167
  %v169 = vpop.f32.mrb[0].mxu0
  %170 = vmatprep.mubr.f32.mxu0 0.0
  %171 = vmatmul.mubr.f32.gmra.mrb[0].mxu0 %v55
  %v172 = vpop.f32.mrb[0].mxu0
  %v173 = vadd.f32 0.0, %v172
  %v174 = vpop.f32.mrb[0].mxu0
  %175 = vmatprep.mubr.f32.mxu0 0.0
  %176 = vmatmul.mubr.f32.gmra.mrb[0].mxu0 %v58
  %v177 = vpop.f32.mrb[0].mxu0
  %v178 = vadd.f32 0.0, %v177
  %v179 = vpop.f32.mrb[0].mxu0
  %180 = vmatprep.mubr.f32.mxu0 0.0
  %181 = vmatmul.mubr.f32.gmra.mrb[0].mxu0 %v61
  %v182 = vpop.f32.mrb[0].mxu0
  %v183 = vadd.f32 0.0, %v182
  %v184 = vpop.f32.mrb[0].mxu0
  %185 = vmatprep.mubr.f32.mxu0 0.0
  %186 = vmatmul.mubr.f32.gmra.mrb[0].mxu0 %v64
  %v187 = vpop.f32.mrb[0].mxu0
  %v188 = vadd.f32 0.0, %v187
  %v189 = vpop.f32.mrb[0].mxu0
  %190 = vmatprep.mubr.f32.mxu0 0.0
  %191 = vmatmul.mubr.f32.gmra.mrb[0].mxu0 %v67
  %v192 = vpop.f32.mrb[0].mxu0
  %v193 = vadd.f32 0.0, %v192
  %v194 = vpop.f32.mrb[0].mxu0
  %195 = vmatprep.mubr.f32.mxu0 0.0
  %196 = vmatmul.mubr.f32.gmra.mrb[0].mxu0 %v70
  %v197 = vpop.f32.mrb[0].mxu0
  %v198 = vadd.f32 0.0, %v197
  %v199 = vpop.f32.mrb[0].mxu0
  %200 = vmatprep.mubr.f32.mxu0 0.0
  %201 = vmatmul.mubr.f32.gmra.mrb[0].mxu0 %v73
  %v202 = vpop.f32.mrb[0].mxu0
  %v203 = vadd.f32 0.0, %v202
  %v204 = vpop.f32.mrb[0].mxu0
  %205 = vmatprep.mubr.f32.mxu0 0.0
  %206 = vmatmul.mubr.f32.gmra.mrb[0].mxu0 %v76
  %v207 = vpop.f32.mrb[0].mxu0
  %v208 = vadd.f32 0.0, %v207
  %v209 = vpop.f32.mrb[0].mxu0
  %210 = vmatprep.mubr.f32.mxu0 0.0
  %211 = vmatmul.mubr.f32.gmra.mrb[0].mxu0 %v79
  %v212 = vpop.f32.mrb[0].mxu0
  %v213 = vadd.f32 0.0, %v212
  %v214 = vpop.f32.mrb[0].mxu0
  %215 = vmatprep.mubr.f32.mxu0 0.0
  %216 = vmatmul.mubr.f32.gmra.mrb[0].mxu0 %v82
  %v217 = vpop.f32.mrb[0].mxu0
  %v218 = vadd.f32 0.0, %v217
  %v219 = vpop.f32.mrb[0].mxu0
  %220 = vmatprep.mubr.f32.mxu0 0.0
  %221 = vmatmul.mubr.f32.gmra.mrb[0].mxu0 %v85
  %v222 = vpop.f32.mrb[0].mxu0
  %v223 = vadd.f32 0.0, %v222
  %v224 = vpop.f32.mrb[0].mxu0
  %225 = vmatprep.mubr.f32.mxu0 0.0
  %226 = vmatmul.mubr.f32.gmra.mrb[0].mxu0 %v88
  %v227 = vpop.f32.mrb[0].mxu0
  %v228 = vadd.f32 0.0, %v227
  %v229 = vpop.f32.mrb[0].mxu0
  %230 = vmatprep.mubr.f32.mxu0 0.0
  %231 = vmatmul.mubr.f32.gmra.mrb[0].mxu0 %v91
  %v232 = vpop.f32.mrb[0].mxu0
  %v233 = vadd.f32 0.0, %v232
  %v234 = vpop.f32.mrb[0].mxu0
  %235 = vmatprep.mubr.f32.mxu0 0.0
  %236 = vmatmul.mubr.f32.gmra.mrb[0].mxu0 %v94
  %v237 = vpop.f32.mrb[0].mxu0
  %v238 = vadd.f32 0.0, %v237
  %v239 = vpop.f32.mrb[0].mxu0
  %240 = vdwg.mxu0
  %v241 = vmul.f32 %v14, %v163
  %v242 = vmul.f32 %v15, %v168
  %v243 = vmul.f32 %v16, %v173
  %v244 = vmul.f32 %v17, %v178
  %v245 = vmul.f32 %v18, %v183
  %v246 = vmul.f32 %v19, %v188
  %v247 = vmul.f32 %v20, %v193
  %v248 = vmul.f32 %v21, %v198
  %v249 = vmul.f32 %v22, %v203
  %v250 = vmul.f32 %v23, %v208
  %v251 = vmul.f32 %v24, %v213
  %v252 = vmul.f32 %v25, %v218
  %v253 = vmul.f32 %v26, %v223
  %v254 = vmul.f32 %v27, %v228
  %v255 = vmul.f32 %v28, %v233
  %v256 = vmul.f32 %v29, %v238
  %273 = vrot.lane.b32.xlu0 %v241, 124
  %v274 = vpop.permute.xlu0 %273
  %275 = vrot.lane.b32.xlu0 %v242, 124
  %v276 = vpop.permute.xlu0 %275
  %277 = vrot.lane.b32.xlu0 %v243, 124
  %v278 = vpop.permute.xlu0 %277
  %279 = vrot.lane.b32.xlu0 %v244, 124
  %v280 = vpop.permute.xlu0 %279
  %281 = vrot.lane.b32.xlu0 %v245, 124
  %v282 = vpop.permute.xlu0 %281
  %283 = vrot.lane.b32.xlu0 %v246, 124
  %v284 = vpop.permute.xlu0 %283
  %285 = vrot.lane.b32.xlu0 %v247, 124
  %v286 = vpop.permute.xlu0 %285
  %287 = vrot.lane.b32.xlu0 %v248, 124
  %v288 = vpop.permute.xlu0 %287
  %289 = vrot.lane.b32.xlu0 %v249, 124
  %v290 = vpop.permute.xlu0 %289
  %291 = vrot.lane.b32.xlu0 %v250, 124
  %v292 = vpop.permute.xlu0 %291
  %293 = vrot.lane.b32.xlu0 %v251, 124
  %v294 = vpop.permute.xlu0 %293
  %295 = vrot.lane.b32.xlu0 %v252, 124
  %v296 = vpop.permute.xlu0 %295
  %297 = vrot.lane.b32.xlu0 %v253, 124
  %v298 = vpop.permute.xlu0 %297
  %299 = vrot.lane.b32.xlu0 %v254, 124
  %v300 = vpop.permute.xlu0 %299
  %301 = vrot.lane.b32.xlu0 %v255, 124
  %v302 = vpop.permute.xlu0 %301
  %303 = vrot.lane.b32.xlu0 %v256, 124
  %v304 = vpop.permute.xlu0 %303
  %321 = vrot.lane.b32.xlu0 %v241, 28
  %v322 = vpop.permute.xlu0 %321
  %323 = vrot.lane.b32.xlu0 %v242, 28
  %v324 = vpop.permute.xlu0 %323
  %325 = vrot.lane.b32.xlu0 %v243, 28
  %v326 = vpop.permute.xlu0 %325
  %327 = vrot.lane.b32.xlu0 %v244, 28
  %v328 = vpop.permute.xlu0 %327
  %329 = vrot.lane.b32.xlu0 %v245, 28
  %v330 = vpop.permute.xlu0 %329
  %331 = vrot.lane.b32.xlu0 %v246, 28
  %v332 = vpop.permute.xlu0 %331
  %333 = vrot.lane.b32.xlu0 %v247, 28
  %v334 = vpop.permute.xlu0 %333
  %335 = vrot.lane.b32.xlu0 %v248, 28
  %v336 = vpop.permute.xlu0 %335
  %337 = vrot.lane.b32.xlu0 %v249, 28
  %v338 = vpop.permute.xlu0 %337
  %339 = vrot.lane.b32.xlu0 %v250, 28
  %v340 = vpop.permute.xlu0 %339
  %341 = vrot.lane.b32.xlu0 %v251, 28
  %v342 = vpop.permute.xlu0 %341
  %343 = vrot.lane.b32.xlu0 %v252, 28
  %v344 = vpop.permute.xlu0 %343
  %345 = vrot.lane.b32.xlu0 %v253, 28
  %v346 = vpop.permute.xlu0 %345
  %347 = vrot.lane.b32.xlu0 %v254, 28
  %v348 = vpop.permute.xlu0 %347
  %349 = vrot.lane.b32.xlu0 %v255, 28
  %v350 = vpop.permute.xlu0 %349
  %351 = vrot.lane.b32.xlu0 %v256, 28
  %v352 = vpop.permute.xlu0 %351
  %vm369 = vcmask 228352
  %v370 = vsel %vm369, %v274, %v322
  %v371 = vsel %vm369, %v276, %v324
  %v372 = vsel %vm369, %v278, %v326
  %v373 = vsel %vm369, %v280, %v328
  %v374 = vsel %vm369, %v282, %v330
  %v375 = vsel %vm369, %v284, %v332
  %v376 = vsel %vm369, %v286, %v334
  %v377 = vsel %vm369, %v288, %v336
  %v378 = vsel %vm369, %v290, %v338
  %v379 = vsel %vm369, %v292, %v340
  %v380 = vsel %vm369, %v294, %v342
  %v381 = vsel %vm369, %v296, %v344
  %v382 = vsel %vm369, %v298, %v346
  %v383 = vsel %vm369, %v300, %v348
  %v384 = vsel %vm369, %v302, %v350
  %v385 = vsel %vm369, %v304, %v352
  %v386 = vadd.f32 %v241, %v370
  %v387 = vadd.f32 %v242, %v371
  %v388 = vadd.f32 %v243, %v372
  %v389 = vadd.f32 %v244, %v373
  %v390 = vadd.f32 %v245, %v374
  %v391 = vadd.f32 %v246, %v375
  %v392 = vadd.f32 %v247, %v376
  %v393 = vadd.f32 %v248, %v377
  %v394 = vadd.f32 %v249, %v378
  %v395 = vadd.f32 %v250, %v379
  %v396 = vadd.f32 %v251, %v380
  %v397 = vadd.f32 %v252, %v381
  %v398 = vadd.f32 %v253, %v382
  %v399 = vadd.f32 %v254, %v383
  %v400 = vadd.f32 %v255, %v384
  %v401 = vadd.f32 %v256, %v385
  %418 = vrot.lane.b32.xlu0 %v163, 124
  %v419 = vpop.permute.xlu0 %418
  %420 = vrot.lane.b32.xlu0 %v168, 124
  %v421 = vpop.permute.xlu0 %420
  %422 = vrot.lane.b32.xlu0 %v173, 124
  %v423 = vpop.permute.xlu0 %422
  %424 = vrot.lane.b32.xlu0 %v178, 124
  %v425 = vpop.permute.xlu0 %424
  %426 = vrot.lane.b32.xlu0 %v183, 124
  %v427 = vpop.permute.xlu0 %426
  %428 = vrot.lane.b32.xlu0 %v188, 124
  %v429 = vpop.permute.xlu0 %428
  %430 = vrot.lane.b32.xlu0 %v193, 124
  %v431 = vpop.permute.xlu0 %430
  %432 = vrot.lane.b32.xlu0 %v198, 124
  %v433 = vpop.permute.xlu0 %432
  %434 = vrot.lane.b32.xlu0 %v203, 124
  %v435 = vpop.permute.xlu0 %434
  %436 = vrot.lane.b32.xlu0 %v208, 124
  %v437 = vpop.permute.xlu0 %436
  %438 = vrot.lane.b32.xlu0 %v213, 124
  %v439 = vpop.permute.xlu0 %438
  %440 = vrot.lane.b32.xlu0 %v218, 124
  %v441 = vpop.permute.xlu0 %440
  %442 = vrot.lane.b32.xlu0 %v223, 124
  %v443 = vpop.permute.xlu0 %442
  %444 = vrot.lane.b32.xlu0 %v228, 124
  %v445 = vpop.permute.xlu0 %444
  %446 = vrot.lane.b32.xlu0 %v233, 124
  %v447 = vpop.permute.xlu0 %446
  %448 = vrot.lane.b32.xlu0 %v238, 124
  %v449 = vpop.permute.xlu0 %448
  %466 = vrot.lane.b32.xlu0 %v163, 28
  %v467 = vpop.permute.xlu0 %466
  %468 = vrot.lane.b32.xlu0 %v168, 28
  %v469 = vpop.permute.xlu0 %468
  %470 = vrot.lane.b32.xlu0 %v173, 28
  %v471 = vpop.permute.xlu0 %470
  %472 = vrot.lane.b32.xlu0 %v178, 28
  %v473 = vpop.permute.xlu0 %472
  %474 = vrot.lane.b32.xlu0 %v183, 28
  %v475 = vpop.permute.xlu0 %474
  %476 = vrot.lane.b32.xlu0 %v188, 28
  %v477 = vpop.permute.xlu0 %476
  %478 = vrot.lane.b32.xlu0 %v193, 28
  %v479 = vpop.permute.xlu0 %478
  %480 = vrot.lane.b32.xlu0 %v198, 28
  %v481 = vpop.permute.xlu0 %480
  %482 = vrot.lane.b32.xlu0 %v203, 28
  %v483 = vpop.permute.xlu0 %482
  %484 = vrot.lane.b32.xlu0 %v208, 28
  %v485 = vpop.permute.xlu0 %484
  %486 = vrot.lane.b32.xlu0 %v213, 28
  %v487 = vpop.permute.xlu0 %486
  %488 = vrot.lane.b32.xlu0 %v218, 28
  %v489 = vpop.permute.xlu0 %488
  %490 = vrot.lane.b32.xlu0 %v223, 28
  %v491 = vpop.permute.xlu0 %490
  %492 = vrot.lane.b32.xlu0 %v228, 28
  %v493 = vpop.permute.xlu0 %492
  %494 = vrot.lane.b32.xlu0 %v233, 28
  %v495 = vpop.permute.xlu0 %494
  %496 = vrot.lane.b32.xlu0 %v238, 28
  %v497 = vpop.permute.xlu0 %496
  %v514 = vsel %vm369, %v419, %v467
  %v515 = vsel %vm369, %v421, %v469
  %v516 = vsel %vm369, %v423, %v471
  %v517 = vsel %vm369, %v425, %v473
  %v518 = vsel %vm369, %v427, %v475
  %v519 = vsel %vm369, %v429, %v477
  %v520 = vsel %vm369, %v431, %v479
  %v521 = vsel %vm369, %v433, %v481
  %v522 = vsel %vm369, %v435, %v483
  %v523 = vsel %vm369, %v437, %v485
  %v524 = vsel %vm369, %v439, %v487
  %v525 = vsel %vm369, %v441, %v489
  %v526 = vsel %vm369, %v443, %v491
  %v527 = vsel %vm369, %v445, %v493
  %v528 = vsel %vm369, %v447, %v495
  %v529 = vsel %vm369, %v449, %v497
  %v530 = vadd.f32 %v163, %v514
  %v531 = vadd.f32 %v168, %v515
  %v532 = vadd.f32 %v173, %v516
  %v533 = vadd.f32 %v178, %v517
  %v534 = vadd.f32 %v183, %v518
  %v535 = vadd.f32 %v188, %v519
  %v536 = vadd.f32 %v193, %v520
  %v537 = vadd.f32 %v198, %v521
  %v538 = vadd.f32 %v203, %v522
  %v539 = vadd.f32 %v208, %v523
  %v540 = vadd.f32 %v213, %v524
  %v541 = vadd.f32 %v218, %v525
  %v542 = vadd.f32 %v223, %v526
  %v543 = vadd.f32 %v228, %v527
  %v544 = vadd.f32 %v233, %v528
  %v545 = vadd.f32 %v238, %v529
  %562 = vrot.lane.b32.xlu0 %v386, 120
  %v563 = vpop.permute.xlu0 %562
  %564 = vrot.lane.b32.xlu0 %v387, 120
  %v565 = vpop.permute.xlu0 %564
  %566 = vrot.lane.b32.xlu0 %v388, 120
  %v567 = vpop.permute.xlu0 %566
  %568 = vrot.lane.b32.xlu0 %v389, 120
  %v569 = vpop.permute.xlu0 %568
  %570 = vrot.lane.b32.xlu0 %v390, 120
  %v571 = vpop.permute.xlu0 %570
  %572 = vrot.lane.b32.xlu0 %v391, 120
  %v573 = vpop.permute.xlu0 %572
  %574 = vrot.lane.b32.xlu0 %v392, 120
  %v575 = vpop.permute.xlu0 %574
  %576 = vrot.lane.b32.xlu0 %v393, 120
  %v577 = vpop.permute.xlu0 %576
  %578 = vrot.lane.b32.xlu0 %v394, 120
  %v579 = vpop.permute.xlu0 %578
  %580 = vrot.lane.b32.xlu0 %v395, 120
  %v581 = vpop.permute.xlu0 %580
  %582 = vrot.lane.b32.xlu0 %v396, 120
  %v583 = vpop.permute.xlu0 %582
  %584 = vrot.lane.b32.xlu0 %v397, 120
  %v585 = vpop.permute.xlu0 %584
  %586 = vrot.lane.b32.xlu0 %v398, 120
  %v587 = vpop.permute.xlu0 %586
  %588 = vrot.lane.b32.xlu0 %v399, 120
  %v589 = vpop.permute.xlu0 %588
  %590 = vrot.lane.b32.xlu0 %v400, 120
  %v591 = vpop.permute.xlu0 %590
  %592 = vrot.lane.b32.xlu0 %v401, 120
  %v593 = vpop.permute.xlu0 %592
  %610 = vrot.lane.b32.xlu0 %v386, 24
  %v611 = vpop.permute.xlu0 %610
  %612 = vrot.lane.b32.xlu0 %v387, 24
  %v613 = vpop.permute.xlu0 %612
  %614 = vrot.lane.b32.xlu0 %v388, 24
  %v615 = vpop.permute.xlu0 %614
  %616 = vrot.lane.b32.xlu0 %v389, 24
  %v617 = vpop.permute.xlu0 %616
  %618 = vrot.lane.b32.xlu0 %v390, 24
  %v619 = vpop.permute.xlu0 %618
  %620 = vrot.lane.b32.xlu0 %v391, 24
  %v621 = vpop.permute.xlu0 %620
  %622 = vrot.lane.b32.xlu0 %v392, 24
  %v623 = vpop.permute.xlu0 %622
  %624 = vrot.lane.b32.xlu0 %v393, 24
  %v625 = vpop.permute.xlu0 %624
  %626 = vrot.lane.b32.xlu0 %v394, 24
  %v627 = vpop.permute.xlu0 %626
  %628 = vrot.lane.b32.xlu0 %v395, 24
  %v629 = vpop.permute.xlu0 %628
  %630 = vrot.lane.b32.xlu0 %v396, 24
  %v631 = vpop.permute.xlu0 %630
  %632 = vrot.lane.b32.xlu0 %v397, 24
  %v633 = vpop.permute.xlu0 %632
  %634 = vrot.lane.b32.xlu0 %v398, 24
  %v635 = vpop.permute.xlu0 %634
  %636 = vrot.lane.b32.xlu0 %v399, 24
  %v637 = vpop.permute.xlu0 %636
  %638 = vrot.lane.b32.xlu0 %v400, 24
  %v639 = vpop.permute.xlu0 %638
  %640 = vrot.lane.b32.xlu0 %v401, 24
  %v641 = vpop.permute.xlu0 %640
  %vm658 = vcmask 195584
  %v659 = vsel %vm658, %v563, %v611
  %v660 = vsel %vm658, %v565, %v613
  %v661 = vsel %vm658, %v567, %v615
  %v662 = vsel %vm658, %v569, %v617
  %v663 = vsel %vm658, %v571, %v619
  %v664 = vsel %vm658, %v573, %v621
  %v665 = vsel %vm658, %v575, %v623
  %v666 = vsel %vm658, %v577, %v625
  %v667 = vsel %vm658, %v579, %v627
  %v668 = vsel %vm658, %v581, %v629
  %v669 = vsel %vm658, %v583, %v631
  %v670 = vsel %vm658, %v585, %v633
  %v671 = vsel %vm658, %v587, %v635
  %v672 = vsel %vm658, %v589, %v637
  %v673 = vsel %vm658, %v591, %v639
  %v674 = vsel %vm658, %v593, %v641
  %v675 = vadd.f32 %v386, %v659
  %v676 = vadd.f32 %v387, %v660
  %v677 = vadd.f32 %v388, %v661
  %v678 = vadd.f32 %v389, %v662
  %v679 = vadd.f32 %v390, %v663
  %v680 = vadd.f32 %v391, %v664
  %v681 = vadd.f32 %v392, %v665
  %v682 = vadd.f32 %v393, %v666
  %v683 = vadd.f32 %v394, %v667
  %v684 = vadd.f32 %v395, %v668
  %v685 = vadd.f32 %v396, %v669
  %v686 = vadd.f32 %v397, %v670
  %v687 = vadd.f32 %v398, %v671
  %v688 = vadd.f32 %v399, %v672
  %v689 = vadd.f32 %v400, %v673
  %v690 = vadd.f32 %v401, %v674
  %707 = vrot.lane.b32.xlu0 %v530, 120
  %v708 = vpop.permute.xlu0 %707
  %709 = vrot.lane.b32.xlu0 %v531, 120
  %v710 = vpop.permute.xlu0 %709
  %711 = vrot.lane.b32.xlu0 %v532, 120
  %v712 = vpop.permute.xlu0 %711
  %713 = vrot.lane.b32.xlu0 %v533, 120
  %v714 = vpop.permute.xlu0 %713
  %715 = vrot.lane.b32.xlu0 %v534, 120
  %v716 = vpop.permute.xlu0 %715
  %717 = vrot.lane.b32.xlu0 %v535, 120
  %v718 = vpop.permute.xlu0 %717
  %719 = vrot.lane.b32.xlu0 %v536, 120
  %v720 = vpop.permute.xlu0 %719
  %721 = vrot.lane.b32.xlu0 %v537, 120
  %v722 = vpop.permute.xlu0 %721
  %723 = vrot.lane.b32.xlu0 %v538, 120
  %v724 = vpop.permute.xlu0 %723
  %725 = vrot.lane.b32.xlu0 %v539, 120
  %v726 = vpop.permute.xlu0 %725
  %727 = vrot.lane.b32.xlu0 %v540, 120
  %v728 = vpop.permute.xlu0 %727
  %729 = vrot.lane.b32.xlu0 %v541, 120
  %v730 = vpop.permute.xlu0 %729
  %731 = vrot.lane.b32.xlu0 %v542, 120
  %v732 = vpop.permute.xlu0 %731
  %733 = vrot.lane.b32.xlu0 %v543, 120
  %v734 = vpop.permute.xlu0 %733
  %735 = vrot.lane.b32.xlu0 %v544, 120
  %v736 = vpop.permute.xlu0 %735
  %737 = vrot.lane.b32.xlu0 %v545, 120
  %v738 = vpop.permute.xlu0 %737
  %755 = vrot.lane.b32.xlu0 %v530, 24
  %v756 = vpop.permute.xlu0 %755
  %757 = vrot.lane.b32.xlu0 %v531, 24
  %v758 = vpop.permute.xlu0 %757
  %759 = vrot.lane.b32.xlu0 %v532, 24
  %v760 = vpop.permute.xlu0 %759
  %761 = vrot.lane.b32.xlu0 %v533, 24
  %v762 = vpop.permute.xlu0 %761
  %763 = vrot.lane.b32.xlu0 %v534, 24
  %v764 = vpop.permute.xlu0 %763
  %765 = vrot.lane.b32.xlu0 %v535, 24
  %v766 = vpop.permute.xlu0 %765
  %767 = vrot.lane.b32.xlu0 %v536, 24
  %v768 = vpop.permute.xlu0 %767
  %769 = vrot.lane.b32.xlu0 %v537, 24
  %v770 = vpop.permute.xlu0 %769
  %771 = vrot.lane.b32.xlu0 %v538, 24
  %v772 = vpop.permute.xlu0 %771
  %773 = vrot.lane.b32.xlu0 %v539, 24
  %v774 = vpop.permute.xlu0 %773
  %775 = vrot.lane.b32.xlu0 %v540, 24
  %v776 = vpop.permute.xlu0 %775
  %777 = vrot.lane.b32.xlu0 %v541, 24
  %v778 = vpop.permute.xlu0 %777
  %779 = vrot.lane.b32.xlu0 %v542, 24
  %v780 = vpop.permute.xlu0 %779
  %781 = vrot.lane.b32.xlu0 %v543, 24
  %v782 = vpop.permute.xlu0 %781
  %783 = vrot.lane.b32.xlu0 %v544, 24
  %v784 = vpop.permute.xlu0 %783
  %785 = vrot.lane.b32.xlu0 %v545, 24
  %v786 = vpop.permute.xlu0 %785
  %v803 = vsel %vm658, %v708, %v756
  %v804 = vsel %vm658, %v710, %v758
  %v805 = vsel %vm658, %v712, %v760
  %v806 = vsel %vm658, %v714, %v762
  %v807 = vsel %vm658, %v716, %v764
  %v808 = vsel %vm658, %v718, %v766
  %v809 = vsel %vm658, %v720, %v768
  %v810 = vsel %vm658, %v722, %v770
  %v811 = vsel %vm658, %v724, %v772
  %v812 = vsel %vm658, %v726, %v774
  %v813 = vsel %vm658, %v728, %v776
  %v814 = vsel %vm658, %v730, %v778
  %v815 = vsel %vm658, %v732, %v780
  %v816 = vsel %vm658, %v734, %v782
  %v817 = vsel %vm658, %v736, %v784
  %v818 = vsel %vm658, %v738, %v786
  %v819 = vadd.f32 %v530, %v803
  %v820 = vadd.f32 %v531, %v804
  %v821 = vadd.f32 %v532, %v805
  %v822 = vadd.f32 %v533, %v806
  %v823 = vadd.f32 %v534, %v807
  %v824 = vadd.f32 %v535, %v808
  %v825 = vadd.f32 %v536, %v809
  %v826 = vadd.f32 %v537, %v810
  %v827 = vadd.f32 %v538, %v811
  %v828 = vadd.f32 %v539, %v812
  %v829 = vadd.f32 %v540, %v813
  %v830 = vadd.f32 %v541, %v814
  %v831 = vadd.f32 %v542, %v815
  %v832 = vadd.f32 %v543, %v816
  %v833 = vadd.f32 %v544, %v817
  %v834 = vadd.f32 %v545, %v818
  %851 = vrot.lane.b32.xlu0 %v675, 112
  %v852 = vpop.permute.xlu0 %851
  %853 = vrot.lane.b32.xlu0 %v676, 112
  %v854 = vpop.permute.xlu0 %853
  %855 = vrot.lane.b32.xlu0 %v677, 112
  %v856 = vpop.permute.xlu0 %855
  %857 = vrot.lane.b32.xlu0 %v678, 112
  %v858 = vpop.permute.xlu0 %857
  %859 = vrot.lane.b32.xlu0 %v679, 112
  %v860 = vpop.permute.xlu0 %859
  %861 = vrot.lane.b32.xlu0 %v680, 112
  %v862 = vpop.permute.xlu0 %861
  %863 = vrot.lane.b32.xlu0 %v681, 112
  %v864 = vpop.permute.xlu0 %863
  %865 = vrot.lane.b32.xlu0 %v682, 112
  %v866 = vpop.permute.xlu0 %865
  %867 = vrot.lane.b32.xlu0 %v683, 112
  %v868 = vpop.permute.xlu0 %867
  %869 = vrot.lane.b32.xlu0 %v684, 112
  %v870 = vpop.permute.xlu0 %869
  %871 = vrot.lane.b32.xlu0 %v685, 112
  %v872 = vpop.permute.xlu0 %871
  %873 = vrot.lane.b32.xlu0 %v686, 112
  %v874 = vpop.permute.xlu0 %873
  %875 = vrot.lane.b32.xlu0 %v687, 112
  %v876 = vpop.permute.xlu0 %875
  %877 = vrot.lane.b32.xlu0 %v688, 112
  %v878 = vpop.permute.xlu0 %877
  %879 = vrot.lane.b32.xlu0 %v689, 112
  %v880 = vpop.permute.xlu0 %879
  %881 = vrot.lane.b32.xlu0 %v690, 112
  %v882 = vpop.permute.xlu0 %881
  %899 = vrot.lane.b32.xlu0 %v675, 16
  %v900 = vpop.permute.xlu0 %899
  %901 = vrot.lane.b32.xlu0 %v676, 16
  %v902 = vpop.permute.xlu0 %901
  %903 = vrot.lane.b32.xlu0 %v677, 16
  %v904 = vpop.permute.xlu0 %903
  %905 = vrot.lane.b32.xlu0 %v678, 16
  %v906 = vpop.permute.xlu0 %905
  %907 = vrot.lane.b32.xlu0 %v679, 16
  %v908 = vpop.permute.xlu0 %907
  %909 = vrot.lane.b32.xlu0 %v680, 16
  %v910 = vpop.permute.xlu0 %909
  %911 = vrot.lane.b32.xlu0 %v681, 16
  %v912 = vpop.permute.xlu0 %911
  %913 = vrot.lane.b32.xlu0 %v682, 16
  %v914 = vpop.permute.xlu0 %913
  %915 = vrot.lane.b32.xlu0 %v683, 16
  %v916 = vpop.permute.xlu0 %915
  %917 = vrot.lane.b32.xlu0 %v684, 16
  %v918 = vpop.permute.xlu0 %917
  %919 = vrot.lane.b32.xlu0 %v685, 16
  %v920 = vpop.permute.xlu0 %919
  %921 = vrot.lane.b32.xlu0 %v686, 16
  %v922 = vpop.permute.xlu0 %921
  %923 = vrot.lane.b32.xlu0 %v687, 16
  %v924 = vpop.permute.xlu0 %923
  %925 = vrot.lane.b32.xlu0 %v688, 16
  %v926 = vpop.permute.xlu0 %925
  %927 = vrot.lane.b32.xlu0 %v689, 16
  %v928 = vpop.permute.xlu0 %927
  %929 = vrot.lane.b32.xlu0 %v690, 16
  %v930 = vpop.permute.xlu0 %929
  %vm947 = vcmask 130048
  %v948 = vsel %vm947, %v852, %v900
  %v949 = vsel %vm947, %v854, %v902
  %v950 = vsel %vm947, %v856, %v904
  %v951 = vsel %vm947, %v858, %v906
  %v952 = vsel %vm947, %v860, %v908
  %v953 = vsel %vm947, %v862, %v910
  %v954 = vsel %vm947, %v864, %v912
  %v955 = vsel %vm947, %v866, %v914
  %v956 = vsel %vm947, %v868, %v916
  %v957 = vsel %vm947, %v870, %v918
  %v958 = vsel %vm947, %v872, %v920
  %v959 = vsel %vm947, %v874, %v922
  %v960 = vsel %vm947, %v876, %v924
  %v961 = vsel %vm947, %v878, %v926
  %v962 = vsel %vm947, %v880, %v928
  %v963 = vsel %vm947, %v882, %v930
  %v964 = vadd.f32 %v675, %v948
  %v965 = vadd.f32 %v676, %v949
  %v966 = vadd.f32 %v677, %v950
  %v967 = vadd.f32 %v678, %v951
  %v968 = vadd.f32 %v679, %v952
  %v969 = vadd.f32 %v680, %v953
  %v970 = vadd.f32 %v681, %v954
  %v971 = vadd.f32 %v682, %v955
  %v972 = vadd.f32 %v683, %v956
  %v973 = vadd.f32 %v684, %v957
  %v974 = vadd.f32 %v685, %v958
  %v975 = vadd.f32 %v686, %v959
  %v976 = vadd.f32 %v687, %v960
  %v977 = vadd.f32 %v688, %v961
  %v978 = vadd.f32 %v689, %v962
  %v979 = vadd.f32 %v690, %v963
  %996 = vrot.lane.b32.xlu0 %v819, 112
  %v997 = vpop.permute.xlu0 %996
  %998 = vrot.lane.b32.xlu0 %v820, 112
  %v999 = vpop.permute.xlu0 %998
  %1000 = vrot.lane.b32.xlu0 %v821, 112
  %v1001 = vpop.permute.xlu0 %1000
  %1002 = vrot.lane.b32.xlu0 %v822, 112
  %v1003 = vpop.permute.xlu0 %1002
  %1004 = vrot.lane.b32.xlu0 %v823, 112
  %v1005 = vpop.permute.xlu0 %1004
  %1006 = vrot.lane.b32.xlu0 %v824, 112
  %v1007 = vpop.permute.xlu0 %1006
  %1008 = vrot.lane.b32.xlu0 %v825, 112
  %v1009 = vpop.permute.xlu0 %1008
  %1010 = vrot.lane.b32.xlu0 %v826, 112
  %v1011 = vpop.permute.xlu0 %1010
  %1012 = vrot.lane.b32.xlu0 %v827, 112
  %v1013 = vpop.permute.xlu0 %1012
  %1014 = vrot.lane.b32.xlu0 %v828, 112
  %v1015 = vpop.permute.xlu0 %1014
  %1016 = vrot.lane.b32.xlu0 %v829, 112
  %v1017 = vpop.permute.xlu0 %1016
  %1018 = vrot.lane.b32.xlu0 %v830, 112
  %v1019 = vpop.permute.xlu0 %1018
  %1020 = vrot.lane.b32.xlu0 %v831, 112
  %v1021 = vpop.permute.xlu0 %1020
  %1022 = vrot.lane.b32.xlu0 %v832, 112
  %v1023 = vpop.permute.xlu0 %1022
  %1024 = vrot.lane.b32.xlu0 %v833, 112
  %v1025 = vpop.permute.xlu0 %1024
  %1026 = vrot.lane.b32.xlu0 %v834, 112
  %v1027 = vpop.permute.xlu0 %1026
  %1044 = vrot.lane.b32.xlu0 %v819, 16
  %v1045 = vpop.permute.xlu0 %1044
  %1046 = vrot.lane.b32.xlu0 %v820, 16
  %v1047 = vpop.permute.xlu0 %1046
  %1048 = vrot.lane.b32.xlu0 %v821, 16
  %v1049 = vpop.permute.xlu0 %1048
  %1050 = vrot.lane.b32.xlu0 %v822, 16
  %v1051 = vpop.permute.xlu0 %1050
  %1052 = vrot.lane.b32.xlu0 %v823, 16
  %v1053 = vpop.permute.xlu0 %1052
  %1054 = vrot.lane.b32.xlu0 %v824, 16
  %v1055 = vpop.permute.xlu0 %1054
  %1056 = vrot.lane.b32.xlu0 %v825, 16
  %v1057 = vpop.permute.xlu0 %1056
  %1058 = vrot.lane.b32.xlu0 %v826, 16
  %v1059 = vpop.permute.xlu0 %1058
  %1060 = vrot.lane.b32.xlu0 %v827, 16
  %v1061 = vpop.permute.xlu0 %1060
  %1062 = vrot.lane.b32.xlu0 %v828, 16
  %v1063 = vpop.permute.xlu0 %1062
  %1064 = vrot.lane.b32.xlu0 %v829, 16
  %v1065 = vpop.permute.xlu0 %1064
  %1066 = vrot.lane.b32.xlu0 %v830, 16
  %v1067 = vpop.permute.xlu0 %1066
  %1068 = vrot.lane.b32.xlu0 %v831, 16
  %v1069 = vpop.permute.xlu0 %1068
  %1070 = vrot.lane.b32.xlu0 %v832, 16
  %v1071 = vpop.permute.xlu0 %1070
  %1072 = vrot.lane.b32.xlu0 %v833, 16
  %v1073 = vpop.permute.xlu0 %1072
  %1074 = vrot.lane.b32.xlu0 %v834, 16
  %v1075 = vpop.permute.xlu0 %1074
  %v1092 = vsel %vm947, %v997, %v1045
  %v1093 = vsel %vm947, %v999, %v1047
  %v1094 = vsel %vm947, %v1001, %v1049
  %v1095 = vsel %vm947, %v1003, %v1051
  %v1096 = vsel %vm947, %v1005, %v1053
  %v1097 = vsel %vm947, %v1007, %v1055
  %v1098 = vsel %vm947, %v1009, %v1057
  %v1099 = vsel %vm947, %v1011, %v1059
  %v1100 = vsel %vm947, %v1013, %v1061
  %v1101 = vsel %vm947, %v1015, %v1063
  %v1102 = vsel %vm947, %v1017, %v1065
  %v1103 = vsel %vm947, %v1019, %v1067
  %v1104 = vsel %vm947, %v1021, %v1069
  %v1105 = vsel %vm947, %v1023, %v1071
  %v1106 = vsel %vm947, %v1025, %v1073
  %v1107 = vsel %vm947, %v1027, %v1075
  %v1108 = vadd.f32 %v819, %v1092
  %v1109 = vadd.f32 %v820, %v1093
  %v1110 = vadd.f32 %v821, %v1094
  %v1111 = vadd.f32 %v822, %v1095
  %v1112 = vadd.f32 %v823, %v1096
  %v1113 = vadd.f32 %v824, %v1097
  %v1114 = vadd.f32 %v825, %v1098
  %v1115 = vadd.f32 %v826, %v1099
  %v1116 = vadd.f32 %v827, %v1100
  %v1117 = vadd.f32 %v828, %v1101
  %v1118 = vadd.f32 %v829, %v1102
  %v1119 = vadd.f32 %v830, %v1103
  %v1120 = vadd.f32 %v831, %v1104
  %v1121 = vadd.f32 %v832, %v1105
  %v1122 = vadd.f32 %v833, %v1106
  %v1123 = vadd.f32 %v834, %v1107
  %v1124 = vmax.f32 %v1108, 1.0
  %v1125 = vmax.f32 %v1109, 1.0
  %v1126 = vmax.f32 %v1110, 1.0
  %v1127 = vmax.f32 %v1111, 1.0
  %v1128 = vmax.f32 %v1112, 1.0
  %v1129 = vmax.f32 %v1113, 1.0
  %v1130 = vmax.f32 %v1114, 1.0
  %v1131 = vmax.f32 %v1115, 1.0
  %v1132 = vmax.f32 %v1116, 1.0
  %v1133 = vmax.f32 %v1117, 1.0
  %v1134 = vmax.f32 %v1118, 1.0
  %v1135 = vmax.f32 %v1119, 1.0
  %v1136 = vmax.f32 %v1120, 1.0
  %v1137 = vmax.f32 %v1121, 1.0
  %v1138 = vmax.f32 %v1122, 1.0
  %v1139 = vmax.f32 %v1123, 1.0
  %v1140 = vrcp.pop %v1124
  %v1141 = vmul.f32 %v964, %v1140
  %v1142 = vrcp.pop %v1125
  %v1143 = vmul.f32 %v965, %v1142
  %v1144 = vrcp.pop %v1126
  %v1145 = vmul.f32 %v966, %v1144
  %v1146 = vrcp.pop %v1127
  %v1147 = vmul.f32 %v967, %v1146
  %v1148 = vrcp.pop %v1128
  %v1149 = vmul.f32 %v968, %v1148
  %v1150 = vrcp.pop %v1129
  %v1151 = vmul.f32 %v969, %v1150
  %v1152 = vrcp.pop %v1130
  %v1153 = vmul.f32 %v970, %v1152
  %v1154 = vrcp.pop %v1131
  %v1155 = vmul.f32 %v971, %v1154
  %v1156 = vrcp.pop %v1132
  %v1157 = vmul.f32 %v972, %v1156
  %v1158 = vrcp.pop %v1133
  %v1159 = vmul.f32 %v973, %v1158
  %v1160 = vrcp.pop %v1134
  %v1161 = vmul.f32 %v974, %v1160
  %v1162 = vrcp.pop %v1135
  %v1163 = vmul.f32 %v975, %v1162
  %v1164 = vrcp.pop %v1136
  %v1165 = vmul.f32 %v976, %v1164
  %v1166 = vrcp.pop %v1137
  %v1167 = vmul.f32 %v977, %v1166
  %v1168 = vrcp.pop %v1138
  %v1169 = vmul.f32 %v978, %v1168
  %v1170 = vrcp.pop %v1139
  %v1171 = vmul.f32 %v979, %v1170
  %vm1172 = vcmp.gt.f32.partialorder %v163, 0.5
  %vm1173 = vcmp.gt.f32.partialorder %v168, 0.5
  %vm1174 = vcmp.gt.f32.partialorder %v173, 0.5
  %vm1175 = vcmp.gt.f32.partialorder %v178, 0.5
  %vm1176 = vcmp.gt.f32.partialorder %v183, 0.5
  %vm1177 = vcmp.gt.f32.partialorder %v188, 0.5
  %vm1178 = vcmp.gt.f32.partialorder %v193, 0.5
  %vm1179 = vcmp.gt.f32.partialorder %v198, 0.5
  %vm1180 = vcmp.gt.f32.partialorder %v203, 0.5
  %vm1181 = vcmp.gt.f32.partialorder %v208, 0.5
  %vm1182 = vcmp.gt.f32.partialorder %v213, 0.5
  %vm1183 = vcmp.gt.f32.partialorder %v218, 0.5
  %vm1184 = vcmp.gt.f32.partialorder %v223, 0.5
  %vm1185 = vcmp.gt.f32.partialorder %v228, 0.5
  %vm1186 = vcmp.gt.f32.partialorder %v233, 0.5
  %vm1187 = vcmp.gt.f32.partialorder %v238, 0.5
  %v1188 = vsel %vm1172, %v14, %v1141
  %v1189 = vsel %vm1173, %v15, %v1143
  %v1190 = vsel %vm1174, %v16, %v1145
  %v1191 = vsel %vm1175, %v17, %v1147
  %v1192 = vsel %vm1176, %v18, %v1149
  %v1193 = vsel %vm1177, %v19, %v1151
  %v1194 = vsel %vm1178, %v20, %v1153
  %v1195 = vsel %vm1179, %v21, %v1155
  %v1196 = vsel %vm1180, %v22, %v1157
  %v1197 = vsel %vm1181, %v23, %v1159
  %v1198 = vsel %vm1182, %v24, %v1161
  %v1199 = vsel %vm1183, %v25, %v1163
  %v1200 = vsel %vm1184, %v26, %v1165
  %v1201 = vsel %vm1185, %v27, %v1167
  %v1202 = vsel %vm1186, %v28, %v1169
  %v1203 = vsel %vm1187, %v29, %v1171
  %vm1204 = vcmp.gt.f32.partialorder %v1108, 0.5
  %vm1205 = vcmp.gt.f32.partialorder %v1109, 0.5
  %vm1206 = vcmp.gt.f32.partialorder %v1110, 0.5
  %vm1207 = vcmp.gt.f32.partialorder %v1111, 0.5
  %vm1208 = vcmp.gt.f32.partialorder %v1112, 0.5
  %vm1209 = vcmp.gt.f32.partialorder %v1113, 0.5
  %vm1210 = vcmp.gt.f32.partialorder %v1114, 0.5
  %vm1211 = vcmp.gt.f32.partialorder %v1115, 0.5
  %vm1212 = vcmp.gt.f32.partialorder %v1116, 0.5
  %vm1213 = vcmp.gt.f32.partialorder %v1117, 0.5
  %vm1214 = vcmp.gt.f32.partialorder %v1118, 0.5
  %vm1215 = vcmp.gt.f32.partialorder %v1119, 0.5
  %vm1216 = vcmp.gt.f32.partialorder %v1120, 0.5
  %vm1217 = vcmp.gt.f32.partialorder %v1121, 0.5
  %vm1218 = vcmp.gt.f32.partialorder %v1122, 0.5
  %vm1219 = vcmp.gt.f32.partialorder %v1123, 0.5
  %v1220 = vsel %vm1204, %v1188, 0.0
  %v1221 = vsel %vm1205, %v1189, 0.0
  %v1222 = vsel %vm1206, %v1190, 0.0
  %v1223 = vsel %vm1207, %v1191, 0.0
  %v1224 = vsel %vm1208, %v1192, 0.0
  %v1225 = vsel %vm1209, %v1193, 0.0
  %v1226 = vsel %vm1210, %v1194, 0.0
  %v1227 = vsel %vm1211, %v1195, 0.0
  %v1228 = vsel %vm1212, %v1196, 0.0
  %v1229 = vsel %vm1213, %v1197, 0.0
  %v1230 = vsel %vm1214, %v1198, 0.0
  %v1231 = vsel %vm1215, %v1199, 0.0
  %v1232 = vsel %vm1216, %v1200, 0.0
  %v1233 = vsel %vm1217, %v1201, 0.0
  %v1234 = vsel %vm1218, %v1202, 0.0
  %v1235 = vsel %vm1219, %v1203, 0.0
  %vm1236 = vcmask 261120
  %1237 = vst.msk [vmem:[%s3] sm:$0xff] %vm1236, %v1220
  %1238 = vst.msk [vmem:[%s3 + $0x8] sm:$0xff] %vm1236, %v1221
  %1239 = vst.msk [vmem:[%s3 + $0x10] sm:$0xff] %vm1236, %v1222
  %1240 = vst.msk [vmem:[%s3 + $0x18] sm:$0xff] %vm1236, %v1223
  %1241 = vst.msk [vmem:[%s3 + $0x20] sm:$0xff] %vm1236, %v1224
  %1242 = vst.msk [vmem:[%s3 + $0x28] sm:$0xff] %vm1236, %v1225
  %1243 = vst.msk [vmem:[%s3 + $0x30] sm:$0xff] %vm1236, %v1226
  %1244 = vst.msk [vmem:[%s3 + $0x38] sm:$0xff] %vm1236, %v1227
  %1245 = vst.msk [vmem:[%s3 + $0x40] sm:$0xff] %vm1236, %v1228
  %1246 = vst.msk [vmem:[%s3 + $0x48] sm:$0xff] %vm1236, %v1229
  %1247 = vst.msk [vmem:[%s3 + $0x50] sm:$0xff] %vm1236, %v1230
  %1248 = vst.msk [vmem:[%s3 + $0x58] sm:$0xff] %vm1236, %v1231
  %1249 = vst.msk [vmem:[%s3 + $0x60] sm:$0xff] %vm1236, %v1232
  %1250 = vst.msk [vmem:[%s3 + $0x68] sm:$0xff] %vm1236, %v1233
  %1251 = vst.msk [vmem:[%s3 + $0x70] sm:$0xff] %vm1236, %v1234
  %1252 = vst.msk [vmem:[%s3 + $0x78] sm:$0xff] %vm1236, %v1235
  // Predicated region
  $region14: #{tpu_custom_call.1} parent=0 // pred_check
    _
  $region15: #{tpu_custom_call.1} parent=0 // pred_check_branch
    %1254 = sbr.rel (0) target = $region17
  $region16: #{tpu_custom_call.1} parent=0 // pred_region
    _
  $region17: #{tpu_custom_call.1} parent=0 // pred_fallthru
    _
  // Predicated region
  $region18: #{tpu_custom_call.1} parent=0 // pred_check
    _
  $region19: #{tpu_custom_call.1} parent=0 // pred_check_branch
    %1256 = sbr.rel (0) target = $region21
  $region20: #{tpu_custom_call.1} parent=0 // pred_region
    _
  $region21: #{tpu_custom_call.1} parent=0 // pred_fallthru
    _

</llo_original>
